<compile_context>
chip_gen: v6e
topology: v6e:2x2x1
jax: 0.10.0
libtpu: 0.0.40
codegen_flags: <defaults>
</compile_context>

<pallas_src>
import math
import jax
import jax.numpy as jnp
from jax.experimental import pallas as pl
from jax.experimental.pallas import tpu as pltpu


# ----------------------------------------------------------------------------
# Fused kernel.
#   grid = (num_vocab_tiles,), "arbitrary" (VMEM scratch carried across tiles).
#   Step j == 0: embedding one-hot GEMM, gate GEMMs, gate math, write
#                out_flat -> VMEM scratch and (h_last, c_last) -> hc output.
#   Every step : logits[:, tile_j] = out_flat @ W_lin^T[:, tile_j] + b_lin.
# ----------------------------------------------------------------------------
def fused_lstm_kernel(ids_ref, embed_ref, wxT_ref, whT_ref, b4_ref,
                      h_ref, c_ref, wlinT_ref, blin_ref,
                      logits_ref, hc_ref, out_sc):
    j = pl.program_id(0)

    BS = ids_ref.shape[0]
    B, H = h_ref.shape
    S = BS // B
    Ve = embed_ref.shape[0]
    cdt = embed_ref.dtype

    @pl.when(j == 0)
    def _gate_phase():
        # --- Embedding gather as an exact one-hot MXU GEMM -------------------
        ids = ids_ref[...]                                        # (BS, 1) i32
        vocab_iota = jax.lax.broadcasted_iota(jnp.int32, (BS, Ve), 1)
        onehot = (vocab_iota == ids).astype(cdt)                  # (BS, Ve)
        x = jnp.dot(onehot, embed_ref[...],
                    preferred_element_type=jnp.float32).astype(cdt)  # (BS, E)
        # TODO(synk): for large vocab, keep the embed table in HBM and gather
        # rows via pl.Element / scalar-prefetch DMA instead of one-hot GEMM.

        # --- Single gate GEMM over all B*S rows ------------------------------
        xh = jnp.dot(x, wxT_ref[...],
                     preferred_element_type=jnp.float32)          # (BS, 4H) f32

        # --- Recurrent term: one (B,H)@(H,4H) GEMM, broadcast over S rows ----
        hterm = jnp.dot(h_ref[...], whT_ref[...],
                        preferred_element_type=jnp.float32) + b4_ref[...]  # (B,4H)
        # exact one-hot row->batch selector (no integer div, no reshapes)
        r_i = jax.lax.broadcasted_iota(jnp.int32, (BS, B), 0)
        b_i = jax.lax.broadcasted_iota(jnp.int32, (BS, B), 1)
        diff = r_i - b_i * S
        sel_b = ((diff >= 0) & (diff < S)).astype(jnp.float32)    # (BS, B)
        xh = xh + jnp.dot(sel_b, hterm, preferred_element_type=jnp.float32)
        c_prev = jnp.dot(sel_b, c_ref[...],
                         preferred_element_type=jnp.float32)      # (BS, H) f32

        # --- Gates: all elementwise math stays f32 (v5e VPU/EUP safe) --------
        i_gate = jax.nn.sigmoid(xh[:, 0 * H:1 * H])
        f_gate = jax.nn.sigmoid(xh[:, 1 * H:2 * H])
        o_gate = jax.nn.sigmoid(xh[:, 2 * H:3 * H])
        c_hat = jnp.tanh(xh[:, 3 * H:4 * H])
        c = f_gate * c_prev + i_gate * c_hat                      # (BS, H) f32
        out = o_gate * jnp.tanh(c)                                # (BS, H) f32

        out_sc[...] = out.astype(out_sc.dtype)   # projection operand (VMEM only)

        # --- h_last / c_last via exact one-hot last-timestep selection -------
        lr = jax.lax.broadcasted_iota(jnp.int32, (B, BS), 0) * S + (S - 1)
        lc = jax.lax.broadcasted_iota(jnp.int32, (B, BS), 1)
        sel_last = (lr == lc).astype(jnp.float32)                 # (B, BS)
        hc_ref[0] = jnp.dot(sel_last, out, preferred_element_type=jnp.float32)
        hc_ref[1] = jnp.dot(sel_last, c, preferred_element_type=jnp.float32)

    # --- Vocab projection tile (every grid step) -----------------------------
    acc = jnp.dot(out_sc[...], wlinT_ref[...],
                  preferred_element_type=jnp.float32)             # (BS, tn) f32
    logits_ref[...] = (acc + blin_ref[...]).astype(logits_ref.dtype)


def init_params(key, vocab_size, embed_size, hidden_size):
    init_range = 1.0 / math.sqrt(hidden_size)
    ks = jax.random.split(key, 6)
    u = lambda k, shape: jax.random.uniform(
        k, shape, jnp.float32, -init_range, init_range)
    return {
        "W_x_h": u(ks[0], (4 * hidden_size, embed_size)),
        "b_x_4": u(ks[1], (4 * hidden_size,)),
        "W_h_h": u(ks[2], (4 * hidden_size, hidden_size)),
        "embed": u(ks[3], (vocab_size, embed_size)),
        "W_lin": u(ks[4], (vocab_size, hidden_size)),
        "b_lin": u(ks[5], (vocab_size,)),
    }


def lstm_forward(params, x_ids, output_pre, memory_pre, *,
                 compute_dtype=jnp.bfloat16):
    """Pallas implementation of Lstm.forward (single fused pallas_call).

    x_ids:       (S, B) int32 token ids
    output_pre:  (B, H) previous hidden state (broadcast over S, as in module)
    memory_pre:  (B, H) previous cell state   (broadcast over S)
    compute_dtype: matmul operand dtype (bf16 default; MXU-native on
                   v5e/v6e/v7x).  Accumulation and gate math stay f32.
    returns (logits (B*S, V) f32, (h_last (B, H), c_last (B, H)))
    """
    S, B = x_ids.shape
    H = output_pre.shape[-1]
    V = params["W_lin"].shape[0]
    BS = B * S
    cdt = compute_dtype

    # Token ids in batch-major row order r = b*S + s  -> (BS, 1) int32.
    ids_bs = jnp.transpose(x_ids).reshape(BS, 1).astype(jnp.int32)

    embed = params["embed"].astype(cdt)                          # (V, E)
    wxT = params["W_x_h"].T.astype(cdt)                          # (E, 4H)
    whT = params["W_h_h"].T.astype(cdt)                          # (H, 4H)
    b4 = params["b_x_4"].reshape(1, 4 * H).astype(jnp.float32)   # (1, 4H)
    h0 = output_pre.astype(cdt)                                  # (B, H)
    c0 = memory_pre.astype(jnp.float32)                          # (B, H)
    wlinT = params["W_lin"].T.astype(cdt)                        # (H, V)
    blin = params["b_lin"].reshape(1, V).astype(jnp.float32)     # (1, V)
    E = embed.shape[-1]

    # Vocab tile: lane-dense multiple of 128 once V > 128; cap at 512 so the
    # double-buffered f32 logits tile stays well inside v7x's 32 MiB scoped
    # VMEM even at large B*S.
    if V <= 128:
        tn = V
    else:
        tn = min(512, ((V + 127) // 128) * 128)
    nv = pl.cdiv(V, tn)
    # TODO(synk): on v7x at realistic B/S, add a >=2-way "parallel" grid axis
    # over rows so both TensorCores get work (negligible at B=4, S=8).

    logits, hc = pl.pallas_call(
        fused_lstm_kernel,
        out_shape=(
            jax.ShapeDtypeStruct((BS, V), jnp.float32),      # logits
            jax.ShapeDtypeStruct((2, B, H), jnp.float32),    # [h_last, c_last]
        ),
        grid_spec=pltpu.PrefetchScalarGridSpec(
            num_scalar_prefetch=0,
            grid=(nv,),
            in_specs=[
                pl.BlockSpec((BS, 1), lambda j: (0, 0)),        # ids (resident)
                pl.BlockSpec((V, E), lambda j: (0, 0)),         # embed table
                pl.BlockSpec((E, 4 * H), lambda j: (0, 0)),     # W_x_h^T
                pl.BlockSpec((H, 4 * H), lambda j: (0, 0)),     # W_h_h^T
                pl.BlockSpec((1, 4 * H), lambda j: (0, 0)),     # bias
                pl.BlockSpec((B, H), lambda j: (0, 0)),         # h_pre
                pl.BlockSpec((B, H), lambda j: (0, 0)),         # c_pre
                pl.BlockSpec((H, tn), lambda j: (0, j)),        # W_lin^T tile
                pl.BlockSpec((1, tn), lambda j: (0, j)),        # b_lin tile
            ],
            out_specs=[
                pl.BlockSpec((BS, tn), lambda j: (0, j)),       # logits tile
                pl.BlockSpec((2, B, H), lambda j: (0, 0, 0)),   # hc (resident)
            ],
            scratch_shapes=[pltpu.VMEM((BS, H), cdt)],          # out_flat
        ),
        compiler_params=pltpu.CompilerParams(
            dimension_semantics=("arbitrary",)),                # scratch carry
    )(ids_bs, embed, wxT, whT, b4, h0, c0, wlinT, blin)

    h_last = hc[0]
    c_last = hc[1]
    return logits, (h_last, c_last)


# Pure-JAX reference (mirrors the PyTorch forward) for a correctness check.
def lstm_forward_ref(params, x_ids, output_pre, memory_pre):
    x = jnp.take(params["embed"], x_ids, axis=0)               # (S, B, E)
    x_4 = x @ params["W_x_h"].T + params["b_x_4"]              # (S, B, 4H)
    h_4 = output_pre @ params["W_h_h"].T                       # (B, 4H)
    xh_4 = x_4 + h_4
    xh_i, xh_f, xh_o, xh_c = jnp.split(xh_4, 4, axis=2)
    i_g = jax.nn.sigmoid(xh_i)
    f_g = jax.nn.sigmoid(xh_f)
    o_g = jax.nn.sigmoid(xh_o)
    c_hat = jnp.tanh(xh_c)
    c = f_g * memory_pre + i_g * c_hat
    out = o_g * jnp.tanh(c)
    h_last, c_last = out[-1], c[-1]
    out = jnp.transpose(out, (1, 0, 2)).reshape(-1, out.shape[-1])
    logits = out @ params["W_lin"].T + params["b_lin"]
    return logits, (h_last, c_last)


if __name__ == "__main__":
    batch_size, vocab_size, embed_size, hidden_size, num_layers = 4, 64, 16, 32, 1
    seq_len = 8

    key = jax.random.PRNGKey(0)
    k_par, k_x, k_h, k_c = jax.random.split(key, 4)

    params = init_params(k_par, vocab_size, embed_size, hidden_size)
    x_ids = jax.random.randint(k_x, (seq_len, batch_size), 0, vocab_size,
                               dtype=jnp.int32)
    output_pre = jax.random.normal(k_h, (batch_size, hidden_size), jnp.float32)
    memory_pre = jax.random.normal(k_c, (batch_size, hidden_size), jnp.float32)

    fwd = jax.jit(lstm_forward, static_argnames=("compute_dtype",))

    ref_logits, (ref_h, ref_c) = lstm_forward_ref(
        params, x_ids, output_pre, memory_pre)

    # f32 operand path: faithful to the f32 PyTorch module (tight tolerance).
    logits, (h_last, c_last) = fwd(params, x_ids, output_pre, memory_pre,
                                   compute_dtype=jnp.float32)
    jax.block_until_ready((logits, h_last, c_last))
    assert logits.shape == (batch_size * seq_len, vocab_size)
    assert h_last.shape == (batch_size, hidden_size)
    assert c_last.shape == (batch_size, hidden_size)
    assert jnp.allclose(logits, ref_logits, atol=1e-4, rtol=1e-4)
    assert jnp.allclose(h_last, ref_h, atol=1e-4, rtol=1e-4)
    assert jnp.allclose(c_last, ref_c, atol=1e-4, rtol=1e-4)

    # Default bf16 operand path (recommended on v5e/v6e/v7x): looser tolerance.
    logits_bf, (h_bf, c_bf) = fwd(params, x_ids, output_pre, memory_pre)
    jax.block_until_ready((logits_bf, h_bf, c_bf))
    assert jnp.allclose(logits_bf, ref_logits, atol=5e-2, rtol=5e-2)
    assert jnp.allclose(h_bf, ref_h, atol=5e-2, rtol=5e-2)
    assert jnp.allclose(c_bf, ref_c, atol=5e-2, rtol=5e-2)

    print("KERNEL_OK")
</pallas_src>

<mosaic_0001>
module attributes {stable_mosaic.version = 11 : i64} {
  func.func @fused_lstm_kernel(%arg0: i32, %arg1: memref<32x1xi32, #tpu.memory_space<vmem>>, %arg2: memref<64x16xf32, #tpu.memory_space<vmem>>, %arg3: memref<16x128xf32, #tpu.memory_space<vmem>>, %arg4: memref<32x128xf32, #tpu.memory_space<vmem>>, %arg5: memref<1x128xf32, #tpu.memory_space<vmem>>, %arg6: memref<4x32xf32, #tpu.memory_space<vmem>>, %arg7: memref<4x32xf32, #tpu.memory_space<vmem>>, %arg8: memref<32x64xf32, #tpu.memory_space<vmem>>, %arg9: memref<1x64xf32, #tpu.memory_space<vmem>>, %arg10: memref<32x64xf32, #tpu.memory_space<vmem>>, %arg11: memref<2x4x32xf32, #tpu.memory_space<vmem>>, %arg12: memref<32x32xf32, #tpu.memory_space<vmem>>) attributes {dimension_semantics = [#tpu.dimension_semantics<arbitrary>], iteration_bounds = array<i64: 1>, scalar_prefetch = 0 : i64, scratch_operands = 1 : i64, tpu.core_type = #tpu.core_type<tc>, window_params = [{pipeline_mode = #tpu.pipeline_mode<synchronous>, transform_indices = @transform_0, window_bounds = array<i64: 32, 1>}, {pipeline_mode = #tpu.pipeline_mode<synchronous>, transform_indices = @transform_1, window_bounds = array<i64: 64, 16>}, {pipeline_mode = #tpu.pipeline_mode<synchronous>, transform_indices = @transform_2, window_bounds = array<i64: 16, 128>}, {pipeline_mode = #tpu.pipeline_mode<synchronous>, transform_indices = @transform_3, window_bounds = array<i64: 32, 128>}, {pipeline_mode = #tpu.pipeline_mode<synchronous>, transform_indices = @transform_4, window_bounds = array<i64: 1, 128>}, {pipeline_mode = #tpu.pipeline_mode<synchronous>, transform_indices = @transform_5, window_bounds = array<i64: 4, 32>}, {pipeline_mode = #tpu.pipeline_mode<synchronous>, transform_indices = @transform_6, window_bounds = array<i64: 4, 32>}, {transform_indices = @transform_7, window_bounds = array<i64: 32, 64>}, {transform_indices = @transform_8, window_bounds = array<i64: 1, 64>}, {transform_indices = @transform_9, window_bounds = array<i64: 32, 64>}, {pipeline_mode = #tpu.pipeline_mode<synchronous>, transform_indices = @transform_10, window_bounds = array<i64: 2, 4, 32>}]} {
    %c0_i32 = arith.constant 0 : i32
    %0 = arith.cmpi eq, %arg0, %c0_i32 : i32
    %1 = arith.extui %0 : i1 to i32
    %c0_i32_0 = arith.constant 0 : i32
    %2 = arith.cmpi ne, %1, %c0_i32_0 : i32
    scf.if %2 {
      %c0_8 = arith.constant 0 : index
      %c0_9 = arith.constant 0 : index
      %10 = vector.load %arg1[%c0_8, %c0_9] : memref<32x1xi32, #tpu.memory_space<vmem>>, vector<32x1xi32>
      %11 = tpu.iota {dimensions = array<i32: 1>} : vector<32x64xi32>
      %12 = vector.broadcast %10 : vector<32x1xi32> to vector<32x64xi32>
      %13 = arith.cmpi eq, %11, %12 : vector<32x64xi32>
      %14 = arith.extui %13 : vector<32x64xi1> to vector<32x64xi32>
      %15 = arith.sitofp %14 : vector<32x64xi32> to vector<32x64xf32>
      %c0_10 = arith.constant 0 : index
      %c0_11 = arith.constant 0 : index
      %16 = vector.load %arg2[%c0_10, %c0_11] : memref<64x16xf32, #tpu.memory_space<vmem>>, vector<64x16xf32>
      %cst_12 = arith.constant dense<0.000000e+00> : vector<32x16xf32>
      %17 = tpu.matmul %15, %16, %cst_12 {dimension_numbers = #tpu.dot_dimension_numbers<[1], [0], [0], [1], [0, 0, 1, 1], [], []>} : vector<32x64xf32>, vector<64x16xf32>, vector<32x16xf32> -> vector<32x16xf32>
      %c0_13 = arith.constant 0 : index
      %c0_14 = arith.constant 0 : index
      %18 = vector.load %arg3[%c0_13, %c0_14] : memref<16x128xf32, #tpu.memory_space<vmem>>, vector<16x128xf32>
      %cst_15 = arith.constant dense<0.000000e+00> : vector<32x128xf32>
      %19 = tpu.matmul %17, %18, %cst_15 {dimension_numbers = #tpu.dot_dimension_numbers<[1], [0], [0], [1], [0, 0, 1, 1], [], []>} : vector<32x16xf32>, vector<16x128xf32>, vector<32x128xf32> -> vector<32x128xf32>
      %c0_16 = arith.constant 0 : index
      %c0_17 = arith.constant 0 : index
      %20 = vector.load %arg6[%c0_16, %c0_17] : memref<4x32xf32, #tpu.memory_space<vmem>>, vector<4x32xf32>
      %c0_18 = arith.constant 0 : index
      %c0_19 = arith.constant 0 : index
      %21 = vector.load %arg4[%c0_18, %c0_19] : memref<32x128xf32, #tpu.memory_space<vmem>>, vector<32x128xf32>
      %cst_20 = arith.constant dense<0.000000e+00> : vector<4x128xf32>
      %22 = tpu.matmul %20, %21, %cst_20 {dimension_numbers = #tpu.dot_dimension_numbers<[1], [0], [0], [1], [0, 0, 1, 1], [], []>} : vector<4x32xf32>, vector<32x128xf32>, vector<4x128xf32> -> vector<4x128xf32>
      %c0_21 = arith.constant 0 : index
      %c0_22 = arith.constant 0 : index
      %23 = vector.load %arg5[%c0_21, %c0_22] : memref<1x128xf32, #tpu.memory_space<vmem>>, vector<1x128xf32>
      %24 = vector.broadcast %23 : vector<1x128xf32> to vector<4x128xf32>
      %25 = arith.addf %22, %24 : vector<4x128xf32>
      %26 = tpu.iota {dimensions = array<i32: 0>} : vector<32x4xi32>
      %27 = tpu.iota {dimensions = array<i32: 1>} : vector<32x4xi32>
      %c8_i32 = arith.constant 8 : i32
      %28 = vector.broadcast %c8_i32 : i32 to vector<32x4xi32>
      %29 = arith.muli %27, %28 : vector<32x4xi32>
      %30 = arith.subi %26, %29 : vector<32x4xi32>
      %c0_i32_23 = arith.constant 0 : i32
      %31 = vector.broadcast %c0_i32_23 : i32 to vector<32x4xi32>
      %32 = arith.cmpi sge, %30, %31 : vector<32x4xi32>
      %c8_i32_24 = arith.constant 8 : i32
      %33 = vector.broadcast %c8_i32_24 : i32 to vector<32x4xi32>
      %34 = arith.cmpi slt, %30, %33 : vector<32x4xi32>
      %35 = arith.andi %32, %34 : vector<32x4xi1>
      %36 = arith.extui %35 : vector<32x4xi1> to vector<32x4xi32>
      %37 = arith.sitofp %36 : vector<32x4xi32> to vector<32x4xf32>
      %cst_25 = arith.constant dense<0.000000e+00> : vector<32x128xf32>
      %38 = tpu.matmul %37, %25, %cst_25 {dimension_numbers = #tpu.dot_dimension_numbers<[1], [0], [0], [1], [0, 0, 1, 1], [], []>} : vector<32x4xf32>, vector<4x128xf32>, vector<32x128xf32> -> vector<32x128xf32>
      %39 = arith.addf %19, %38 : vector<32x128xf32>
      %c0_26 = arith.constant 0 : index
      %c0_27 = arith.constant 0 : index
      %40 = vector.load %arg7[%c0_26, %c0_27] : memref<4x32xf32, #tpu.memory_space<vmem>>, vector<4x32xf32>
      %cst_28 = arith.constant dense<0.000000e+00> : vector<32x32xf32>
      %41 = tpu.matmul %37, %40, %cst_28 {dimension_numbers = #tpu.dot_dimension_numbers<[1], [0], [0], [1], [0, 0, 1, 1], [], []>} : vector<32x4xf32>, vector<4x32xf32>, vector<32x32xf32> -> vector<32x32xf32>
      %42 = vector.extract_strided_slice %39 {offsets = [0, 0], sizes = [32, 32], strides = [1, 1]} : vector<32x128xf32> to vector<32x32xf32>
      %43 = arith.negf %42 : vector<32x32xf32>
      %44 = math.exp %43 : vector<32x32xf32>
      %cst_29 = arith.constant 1.000000e+00 : f32
      %45 = vector.broadcast %cst_29 : f32 to vector<32x32xf32>
      %46 = arith.addf %45, %44 : vector<32x32xf32>
      %47 = arith.divf %45, %46 : vector<32x32xf32>
      %48 = vector.extract_strided_slice %39 {offsets = [0, 32], sizes = [32, 32], strides = [1, 1]} : vector<32x128xf32> to vector<32x32xf32>
      %49 = arith.negf %48 : vector<32x32xf32>
      %50 = math.exp %49 : vector<32x32xf32>
      %cst_30 = arith.constant 1.000000e+00 : f32
      %51 = vector.broadcast %cst_30 : f32 to vector<32x32xf32>
      %52 = arith.addf %51, %50 : vector<32x32xf32>
      %53 = arith.divf %51, %52 : vector<32x32xf32>
      %54 = vector.extract_strided_slice %39 {offsets = [0, 64], sizes = [32, 32], strides = [1, 1]} : vector<32x128xf32> to vector<32x32xf32>
      %55 = arith.negf %54 : vector<32x32xf32>
      %56 = math.exp %55 : vector<32x32xf32>
      %cst_31 = arith.constant 1.000000e+00 : f32
      %57 = vector.broadcast %cst_31 : f32 to vector<32x32xf32>
      %58 = arith.addf %57, %56 : vector<32x32xf32>
      %59 = arith.divf %57, %58 : vector<32x32xf32>
      %60 = vector.extract_strided_slice %39 {offsets = [0, 96], sizes = [32, 32], strides = [1, 1]} : vector<32x128xf32> to vector<32x32xf32>
      %61 = math.tanh %60 : vector<32x32xf32>
      %62 = arith.mulf %53, %41 : vector<32x32xf32>
      %63 = arith.mulf %47, %61 : vector<32x32xf32>
      %64 = arith.addf %62, %63 : vector<32x32xf32>
      %65 = math.tanh %64 : vector<32x32xf32>
      %66 = arith.mulf %59, %65 : vector<32x32xf32>
      %c0_32 = arith.constant 0 : index
      %c0_33 = arith.constant 0 : index
      %67 = vector.load %arg12[%c0_32, %c0_33] : memref<32x32xf32, #tpu.memory_space<vmem>>, vector<32x32xf32>
      tpu.vector_store %arg12[%c0_32, %c0_33], %66 {strides = array<i32>} : memref<32x32xf32, #tpu.memory_space<vmem>>, vector<32x32xf32>,
      %68 = tpu.iota {dimensions = array<i32: 0>} : vector<4x32xi32>
      %c8_i32_34 = arith.constant 8 : i32
      %69 = vector.broadcast %c8_i32_34 : i32 to vector<4x32xi32>
      %70 = arith.muli %68, %69 : vector<4x32xi32>
      %c7_i32 = arith.constant 7 : i32
      %71 = vector.broadcast %c7_i32 : i32 to vector<4x32xi32>
      %72 = arith.addi %70, %71 : vector<4x32xi32>
      %73 = tpu.iota {dimensions = array<i32: 1>} : vector<4x32xi32>
      %74 = arith.cmpi eq, %72, %73 : vector<4x32xi32>
      %75 = arith.extui %74 : vector<4x32xi1> to vector<4x32xi32>
      %76 = arith.sitofp %75 : vector<4x32xi32> to vector<4x32xf32>
      %cst_35 = arith.constant dense<0.000000e+00> : vector<4x32xf32>
      %77 = tpu.matmul %76, %66, %cst_35 {dimension_numbers = #tpu.dot_dimension_numbers<[1], [0], [0], [1], [0, 0, 1, 1], [], []>} : vector<4x32xf32>, vector<32x32xf32>, vector<4x32xf32> -> vector<4x32xf32>
      %c0_36 = arith.constant 0 : index
      %c0_37 = arith.constant 0 : index
      %c0_38 = arith.constant 0 : index
      %78 = vector.load %arg11[%c0_36, %c0_37, %c0_38] : memref<2x4x32xf32, #tpu.memory_space<vmem>>, vector<1x4x32xf32>
      %79 = vector.shape_cast %78 : vector<1x4x32xf32> to vector<4x32xf32>
      %80 = vector.shape_cast %77 : vector<4x32xf32> to vector<1x4x32xf32>
      tpu.vector_store %arg11[%c0_36, %c0_37, %c0_38], %80 {strides = array<i32>} : memref<2x4x32xf32, #tpu.memory_space<vmem>>, vector<1x4x32xf32>,
      %cst_39 = arith.constant dense<0.000000e+00> : vector<4x32xf32>
      %81 = tpu.matmul %76, %64, %cst_39 {dimension_numbers = #tpu.dot_dimension_numbers<[1], [0], [0], [1], [0, 0, 1, 1], [], []>} : vector<4x32xf32>, vector<32x32xf32>, vector<4x32xf32> -> vector<4x32xf32>
      %c1 = arith.constant 1 : index
      %c0_40 = arith.constant 0 : index
      %c0_41 = arith.constant 0 : index
      %82 = vector.load %arg11[%c1, %c0_40, %c0_41] : memref<2x4x32xf32, #tpu.memory_space<vmem>>, vector<1x4x32xf32>
      %83 = vector.shape_cast %82 : vector<1x4x32xf32> to vector<4x32xf32>
      %84 = vector.shape_cast %81 : vector<4x32xf32> to vector<1x4x32xf32>
      tpu.vector_store %arg11[%c1, %c0_40, %c0_41], %84 {strides = array<i32>} : memref<2x4x32xf32, #tpu.memory_space<vmem>>, vector<1x4x32xf32>,
    } else {
    }
    %c0 = arith.constant 0 : index
    %c0_1 = arith.constant 0 : index
    %3 = vector.load %arg12[%c0, %c0_1] : memref<32x32xf32, #tpu.memory_space<vmem>>, vector<32x32xf32>
    %c0_2 = arith.constant 0 : index
    %c0_3 = arith.constant 0 : index
    %4 = vector.load %arg8[%c0_2, %c0_3] : memref<32x64xf32, #tpu.memory_space<vmem>>, vector<32x64xf32>
    %cst = arith.constant dense<0.000000e+00> : vector<32x64xf32>
    %5 = tpu.matmul %3, %4, %cst {dimension_numbers = #tpu.dot_dimension_numbers<[1], [0], [0], [1], [0, 0, 1, 1], [], []>} : vector<32x32xf32>, vector<32x64xf32>, vector<32x64xf32> -> vector<32x64xf32>
    %c0_4 = arith.constant 0 : index
    %c0_5 = arith.constant 0 : index
    %6 = vector.load %arg9[%c0_4, %c0_5] : memref<1x64xf32, #tpu.memory_space<vmem>>, vector<1x64xf32>
    %7 = vector.broadcast %6 : vector<1x64xf32> to vector<32x64xf32>
    %8 = arith.addf %5, %7 : vector<32x64xf32>
    %c0_6 = arith.constant 0 : index
    %c0_7 = arith.constant 0 : index
    %9 = vector.load %arg10[%c0_6, %c0_7] : memref<32x64xf32, #tpu.memory_space<vmem>>, vector<32x64xf32>
    tpu.vector_store %arg10[%c0_6, %c0_7], %8 {strides = array<i32>} : memref<32x64xf32, #tpu.memory_space<vmem>>, vector<32x64xf32>,
    return
  }
  func.func @transform_0(%arg0: i32) -> (i32, i32) {
    %c0_i32 = arith.constant 0 : i32
    %c0_i32_0 = arith.constant 0 : i32
    %c0_i32_1 = arith.constant 0 : i32
    return %c0_i32, %c0_i32_0 : i32, i32
  }
  func.func @transform_1(%arg0: i32) -> (i32, i32) {
    %c0_i32 = arith.constant 0 : i32
    %c0_i32_0 = arith.constant 0 : i32
    %c0_i32_1 = arith.constant 0 : i32
    return %c0_i32, %c0_i32_0 : i32, i32
  }
  func.func @transform_2(%arg0: i32) -> (i32, i32) {
    %c0_i32 = arith.constant 0 : i32
    %c0_i32_0 = arith.constant 0 : i32
    %c0_i32_1 = arith.constant 0 : i32
    return %c0_i32, %c0_i32_0 : i32, i32
  }
  func.func @transform_3(%arg0: i32) -> (i32, i32) {
    %c0_i32 = arith.constant 0 : i32
    %c0_i32_0 = arith.constant 0 : i32
    %c0_i32_1 = arith.constant 0 : i32
    return %c0_i32, %c0_i32_0 : i32, i32
  }
  func.func @transform_4(%arg0: i32) -> (i32, i32) {
    %c0_i32 = arith.constant 0 : i32
    %c0_i32_0 = arith.constant 0 : i32
    %c0_i32_1 = arith.constant 0 : i32
    return %c0_i32, %c0_i32_0 : i32, i32
  }
  func.func @transform_5(%arg0: i32) -> (i32, i32) {
    %c0_i32 = arith.constant 0 : i32
    %c0_i32_0 = arith.constant 0 : i32
    %c0_i32_1 = arith.constant 0 : i32
    return %c0_i32, %c0_i32_0 : i32, i32
  }
  func.func @transform_6(%arg0: i32) -> (i32, i32) {
    %c0_i32 = arith.constant 0 : i32
    %c0_i32_0 = arith.constant 0 : i32
    %c0_i32_1 = arith.constant 0 : i32
    return %c0_i32, %c0_i32_0 : i32, i32
  }
  func.func @transform_7(%arg0: i32) -> (i32, i32) {
    %c0_i32 = arith.constant 0 : i32
    %c0_i32_0 = arith.constant 0 : i32
    return %c0_i32, %arg0 : i32, i32
  }
  func.func @transform_8(%arg0: i32) -> (i32, i32) {
    %c0_i32 = arith.constant 0 : i32
    %c0_i32_0 = arith.constant 0 : i32
    return %c0_i32, %arg0 : i32, i32
  }
  func.func @transform_9(%arg0: i32) -> (i32, i32) {
    %c0_i32 = arith.constant 0 : i32
    %c0_i32_0 = arith.constant 0 : i32
    return %c0_i32, %arg0 : i32, i32
  }
  func.func @transform_10(%arg0: i32) -> (i32, i32, i32) {
    %c0_i32 = arith.constant 0 : i32
    %c0_i32_0 = arith.constant 0 : i32
    %c0_i32_1 = arith.constant 0 : i32
    %c0_i32_2 = arith.constant 0 : i32
    return %c0_i32, %c0_i32_0, %c0_i32_1 : i32, i32, i32
  }
}

</mosaic_0001>

<llo_original>
// kernel: lstm_forward.1
$region0: #{lstm_forward.1}
  #allocation0 [shape = 'u32[]', space=smem, size = 0x4, offset = 0x4, fixed_abs, tag = 'smem constant byte address 0x4 - core index']
  #allocation1 [shape = 'u32[144,128]{1,0:T(1,128)}', space=vmem, size = 0x12000, scoped, tag = 'internal scratch']
  #allocation2 [shape = 'f32[32,32]{1,0:T(8,128)}', space=vmem, size = 0x4000, scoped, tag = 'scratch operand']
  %s0 = inlined_call_operand.vmem [shape: s32[32,1], index: 0, kind: input, shape index: {}]
  %s1 = inlined_call_operand.vmem [shape: f32[64,16], index: 1, kind: input, shape index: {}]
  %s2 = inlined_call_operand.vmem [shape: f32[16,128], index: 2, kind: input, shape index: {}]
  %s3 = inlined_call_operand.vmem [shape: f32[32,128], index: 3, kind: input, shape index: {}]
  %s4 = inlined_call_operand.vmem [shape: f32[1,128], index: 4, kind: input, shape index: {}]
  %s5 = inlined_call_operand.vmem [shape: f32[4,32], index: 5, kind: input, shape index: {}]
  %s6 = inlined_call_operand.vmem [shape: f32[4,32], index: 6, kind: input, shape index: {}]
  %s7 = inlined_call_operand.vmem [shape: f32[32,64], index: 7, kind: input, shape index: {}]
  %s8 = inlined_call_operand.vmem [shape: f32[1,64], index: 8, kind: input, shape index: {}]
  %s9 = inlined_call_operand.hbm [shape: f32[32,64], index: 9, kind: output, shape index: {0}]
  %s10 = inlined_call_operand.vmem [shape: f32[2,4,32], index: 10, kind: output, shape index: {1}]
  %11 = xla_tuple %s9, %s10
  %s12 = sld [smem:[#allocation0]]
  $region58: #{lstm_forward.1} parent=0
    _
  %s14 = ssub.s32 1, %s12
  %s15 = scalar_select 0, %s14, %s12
  $region1: #{lstm_forward.1} parent=0
    #allocation3 [shape = 'u8[16384]{0}', space=vmem, size = 0x4000, scoped, tag = 'output window, operand 0, single buffered']
    #allocation4 [shape = 's32[1]{0}', space=sflag, size = 0x4, scoped, tag = 'scoped memory for lstm_forward.1']
    %16 = vsyncpa [#allocation4], 0
    // Predicated region
    $region2: #{lstm_forward.1} parent=1 // pred_check
      _
    $region3: #{lstm_forward.1} parent=1 // pred_check_branch
      %18 = sbr.rel (0) target = $region5
    $region4: #{lstm_forward.1} parent=1 // pred_region
      _
    $region5: #{lstm_forward.1} parent=1 // pred_fallthru
      _
    // Predicated region
    $region6: #{lstm_forward.1} parent=1 // pred_check
      _
    $region7: #{lstm_forward.1} parent=1 // pred_check_branch
      %20 = sbr.rel (0) target = $region9
    $region8: #{lstm_forward.1} parent=1 // pred_region
      _
    $region9: #{lstm_forward.1} parent=1 // pred_fallthru
      _
    // Predicated region
    $region10: #{lstm_forward.1} parent=1 // pred_check
      _
    $region11: #{lstm_forward.1} parent=1 // pred_check_branch
      %22 = sbr.rel (0) target = $region13
    $region12: #{lstm_forward.1} parent=1 // pred_region
      _
    $region13: #{lstm_forward.1} parent=1 // pred_fallthru
      _
    // Predicated region
    $region14: #{lstm_forward.1} parent=1 // pred_check
      _
    $region15: #{lstm_forward.1} parent=1 // pred_check_branch
      %24 = sbr.rel (0) target = $region17
    $region16: #{lstm_forward.1} parent=1 // pred_region
      _
    $region17: #{lstm_forward.1} parent=1 // pred_fallthru
      _
    // Predicated region
    $region18: #{lstm_forward.1} parent=1 // pred_check
      _
    $region19: #{lstm_forward.1} parent=1 // pred_check_branch
      %26 = sbr.rel (0) target = $region21
    $region20: #{lstm_forward.1} parent=1 // pred_region
      _
    $region21: #{lstm_forward.1} parent=1 // pred_fallthru
      _
    // Predicated region
    $region22: #{lstm_forward.1} parent=1 // pred_check
      _
    $region23: #{lstm_forward.1} parent=1 // pred_check_branch
      %28 = sbr.rel (0) target = $region25
    $region24: #{lstm_forward.1} parent=1 // pred_region
      _
    $region25: #{lstm_forward.1} parent=1 // pred_fallthru
      _
    // Predicated region
    $region26: #{lstm_forward.1} parent=1 // pred_check
      _
    $region27: #{lstm_forward.1} parent=1 // pred_check_branch
      %30 = sbr.rel (0) target = $region29
    $region28: #{lstm_forward.1} parent=1 // pred_region
      _
    $region29: #{lstm_forward.1} parent=1 // pred_fallthru
      _
    // Predicated region
    $region30: #{lstm_forward.1} parent=1 // pred_check
      _
    $region31: #{lstm_forward.1} parent=1 // pred_check_branch
      %32 = sbr.rel (0) target = $region33
    $region32: #{lstm_forward.1} parent=1 // pred_region
      _
    $region33: #{lstm_forward.1} parent=1 // pred_fallthru
      _
    // Predicated region
    $region34: #{lstm_forward.1} parent=1 // pred_check
      _
    $region35: #{lstm_forward.1} parent=1 // pred_check_branch
      %34 = sbr.rel (0) target = $region37
    $region36: #{lstm_forward.1} parent=1 // pred_region
      _
    $region37: #{lstm_forward.1} parent=1 // pred_fallthru
      _
    %p35 = scmp.eq.s32.totalorder 0, 0
    // Predicated region
    $region38: #{lstm_forward.1} parent=1 // pred_check
      %p36 = pneg %p35
    $region39: #{lstm_forward.1} parent=1 // pred_check_branch
      %38 = sbr.rel (%p36) target = $region41
    $region40: #{lstm_forward.1} parent=1 // pred_region
      %v39 = vld [vmem:[%s0] sm:$0xff]
      %v40 = vld [vmem:[%s0 + $0x8] sm:$0xff]
      %v41 = vld [vmem:[%s0 + $0x10] sm:$0xff]
      %v42 = vld [vmem:[%s0 + $0x18] sm:$0xff]
      %v43 = vlaneseq
      %v44 = vand.u32 %v43, 127
      %45 = vset.pattern.permute.xlu0 0
      %46 = vperm.xlu0 %45, %v39
      %v47 = vpop.permute.xlu0 %46
      %48 = vset.pattern.permute.xlu0 0
      %49 = vperm.xlu0 %48, %v40
      %v50 = vpop.permute.xlu0 %49
      %51 = vset.pattern.permute.xlu0 0
      %52 = vperm.xlu0 %51, %v41
      %v53 = vpop.permute.xlu0 %52
      %54 = vset.pattern.permute.xlu0 0
      %55 = vperm.xlu0 %54, %v42
      %v56 = vpop.permute.xlu0 %55
      %vm57 = vcmp.eq.s32.totalorder %v44, %v47
      %vm58 = vcmp.eq.s32.totalorder %v44, %v50
      %vm59 = vcmp.eq.s32.totalorder %v44, %v53
      %vm60 = vcmp.eq.s32.totalorder %v44, %v56
      %v61 = vsel %vm57, 1, 0
      %v62 = vsel %vm58, 1, 0
      %v63 = vsel %vm59, 1, 0
      %v64 = vsel %vm60, 1, 0
      %v65 = vcvt.s32.f32 %v61
      %v66 = vcvt.s32.f32 %v62
      %v67 = vcvt.s32.f32 %v63
      %v68 = vcvt.s32.f32 %v64
      %v69 = vld [vmem:[%s1] sm:$0xff]
      %v70 = vld [vmem:[%s1 + $0x8] sm:$0xff]
      %v71 = vld [vmem:[%s1 + $0x10] sm:$0xff]
      %v72 = vld [vmem:[%s1 + $0x18] sm:$0xff]
      %v73 = vld [vmem:[%s1 + $0x20] sm:$0xff]
      %v74 = vld [vmem:[%s1 + $0x28] sm:$0xff]
      %v75 = vld [vmem:[%s1 + $0x30] sm:$0xff]
      %v76 = vld [vmem:[%s1 + $0x38] sm:$0xff]
      %vm77 = vcmask 523264
      %v79 = vsel %vm77, %v65, 0
      %v82 = vsel %vm77, %v66, 0
      %v85 = vsel %vm77, %v67, 0
      %v88 = vsel %vm77, %v68, 0
      %90 = vmatprep.subr.mxu0 0.0
      %91 = vmatpush1.msra.mxu0 0.0
      %92 = vmatprep.subr.mxu0 0.0
      %93 = vmatpush1.msra.mxu0 0.0
      %94 = vmatprep.subr.mxu0 0.0
      %95 = vmatpush1.msra.mxu0 0.0
      %96 = vmatprep.subr.mxu0 0.0
      %97 = vmatpush1.msra.mxu0 0.0
      %98 = vmatprep.subr.mxu0 0.0
      %99 = vmatpush1.msra.mxu0 0.0
      %100 = vmatprep.subr.mxu0 0.0
      %101 = vmatpush1.msra.mxu0 0.0
      %102 = vmatprep.subr.mxu0 0.0
      %103 = vmatpush1.msra.mxu0 0.0
      %104 = vmatprep.subr.mxu0 0.0
      %105 = vmatpush1.msra.mxu0 0.0
      %106 = vmatprep.subr.mxu0 0.0
      %107 = vmatpush1.msra.mxu0 %v76
      %108 = vmatprep.subr.mxu0 0.0
      %109 = vmatpush1.msra.mxu0 %v75
      %110 = vmatprep.subr.mxu0 0.0
      %111 = vmatpush1.msra.mxu0 %v74
      %112 = vmatprep.subr.mxu0 0.0
      %113 = vmatpush1.msra.mxu0 %v73
      %114 = vmatprep.subr.mxu0 0.0
      %115 = vmatpush1.msra.mxu0 %v72
      %116 = vmatprep.subr.mxu0 0.0
      %117 = vmatpush1.msra.mxu0 %v71
      %118 = vmatprep.subr.mxu0 0.0
      %119 = vmatpush1.msra.mxu0 %v70
      %120 = vmatprep.subr.mxu0 0.0
      %121 = vmatpush1.msra.mxu0 %v69
      %122 = vmatprep.subr.mxu0 0.0
      %123 = vmatpush2.msra.mxu0 0.0
      %124 = vmatprep.subr.mxu0 0.0
      %125 = vmatpush2.msra.mxu0 0.0
      %126 = vmatprep.subr.mxu0 0.0
      %127 = vmatpush2.msra.mxu0 0.0
      %128 = vmatprep.subr.mxu0 0.0
      %129 = vmatpush2.msra.mxu0 0.0
      %130 = vmatprep.subr.mxu0 0.0
      %131 = vmatpush2.msra.mxu0 0.0
      %132 = vmatprep.subr.mxu0 0.0
      %133 = vmatpush2.msra.mxu0 0.0
      %134 = vmatprep.subr.mxu0 0.0
      %135 = vmatpush2.msra.mxu0 0.0
      %136 = vmatprep.subr.mxu0 0.0
      %137 = vmatpush2.msra.mxu0 0.0
      %138 = vmatprep.subr.mxu0 0.0
      %139 = vmatpush2.msra.mxu0 0.0
      %140 = vmatprep.subr.mxu0 0.0
      %141 = vmatpush2.msra.mxu0 0.0
      %142 = vmatprep.subr.mxu0 0.0
      %143 = vmatpush2.msra.mxu0 0.0
      %144 = vmatprep.subr.mxu0 0.0
      %145 = vmatpush2.msra.mxu0 0.0
      %146 = vmatprep.subr.mxu0 0.0
      %147 = vmatpush2.msra.mxu0 0.0
      %148 = vmatprep.subr.mxu0 0.0
      %149 = vmatpush2.msra.mxu0 0.0
      %150 = vmatprep.subr.mxu0 0.0
      %151 = vmatpush2.msra.mxu0 0.0
      %152 = vmatprep.subr.mxu0 0.0
      %153 = vmatpush2.msra.mxu0 0.0
      %154 = vmatprep.mubr.f32.mxu0 0.0
      %155 = vmatmul.mubr.f32.gmra.mxu0 %v79
      %v156 = vpop.f32.mrf.mxu0
      %v157 = vadd.f32 0.0, %v156
      %v158 = vpop.f32.mrf.mxu0
      %159 = vmatprep.mubr.f32.mxu0 0.0
      %160 = vmatmul.mubr.f32.gmra.mxu0 %v82
      %v161 = vpop.f32.mrf.mxu0
      %v162 = vadd.f32 0.0, %v161
      %v163 = vpop.f32.mrf.mxu0
      %164 = vmatprep.mubr.f32.mxu0 0.0
      %165 = vmatmul.mubr.f32.gmra.mxu0 %v85
      %v166 = vpop.f32.mrf.mxu0
      %v167 = vadd.f32 0.0, %v166
      %v168 = vpop.f32.mrf.mxu0
      %169 = vmatprep.mubr.f32.mxu0 0.0
      %170 = vmatmul.mubr.f32.gmra.mxu0 %v88
      %v171 = vpop.f32.mrf.mxu0
      %v172 = vadd.f32 0.0, %v171
      %v173 = vpop.f32.mrf.mxu0
      %174 = vdwg.mxu0
      %v175 = vld [vmem:[%s2] sm:$0xff]
      %v176 = vld [vmem:[%s2 + $0x8] sm:$0xff]
      %v177 = vld [vmem:[%s5] sm:$0xf]
      %v178 = vld [vmem:[%s3] sm:$0xff]
      %v179 = vld [vmem:[%s3 + $0x8] sm:$0xff]
      %v180 = vld [vmem:[%s3 + $0x10] sm:$0xff]
      %v181 = vld [vmem:[%s3 + $0x18] sm:$0xff]
      %v182 = vld [vmem:[%s4] sm:$0x1]
      %v184 = vlaneseq
      %v185 = vshrl.u32 %v184, 7
      %v186 = vsub.s32 0, %v185
      %v187 = vrot.slane %v182, %v186
      %vm189 = vcmask 261120
      %v191 = vsel %vm189, %v177, 0
      %193 = vmatprep.subr.mxu0 0.0
      %194 = vmatpush1.msra.mxu0 0.0
      %195 = vmatprep.subr.mxu0 0.0
      %196 = vmatpush1.msra.mxu0 0.0
      %197 = vmatprep.subr.mxu0 0.0
      %198 = vmatpush1.msra.mxu0 0.0
      %199 = vmatprep.subr.mxu0 0.0
      %200 = vmatpush1.msra.mxu0 0.0
      %201 = vmatprep.subr.mxu0 0.0
      %202 = vmatpush1.msra.mxu0 0.0
      %203 = vmatprep.subr.mxu0 0.0
      %204 = vmatpush1.msra.mxu0 0.0
      %205 = vmatprep.subr.mxu0 0.0
      %206 = vmatpush1.msra.mxu0 0.0
      %207 = vmatprep.subr.mxu0 0.0
      %208 = vmatpush1.msra.mxu0 0.0
      %209 = vmatprep.subr.mxu0 0.0
      %210 = vmatpush1.msra.mxu0 0.0
      %211 = vmatprep.subr.mxu0 0.0
      %212 = vmatpush1.msra.mxu0 0.0
      %213 = vmatprep.subr.mxu0 0.0
      %214 = vmatpush1.msra.mxu0 0.0
      %215 = vmatprep.subr.mxu0 0.0
      %216 = vmatpush1.msra.mxu0 0.0
      %217 = vmatprep.subr.mxu0 0.0
      %218 = vmatpush1.msra.mxu0 %v181
      %219 = vmatprep.subr.mxu0 0.0
      %220 = vmatpush1.msra.mxu0 %v180
      %221 = vmatprep.subr.mxu0 0.0
      %222 = vmatpush1.msra.mxu0 %v179
      %223 = vmatprep.subr.mxu0 0.0
      %224 = vmatpush1.msra.mxu0 %v178
      %225 = vmatprep.subr.mxu0 0.0
      %226 = vmatpush2.msra.mxu0 0.0
      %227 = vmatprep.subr.mxu0 0.0
      %228 = vmatpush2.msra.mxu0 0.0
      %229 = vmatprep.subr.mxu0 0.0
      %230 = vmatpush2.msra.mxu0 0.0
      %231 = vmatprep.subr.mxu0 0.0
      %232 = vmatpush2.msra.mxu0 0.0
      %233 = vmatprep.subr.mxu0 0.0
      %234 = vmatpush2.msra.mxu0 0.0
      %235 = vmatprep.subr.mxu0 0.0
      %236 = vmatpush2.msra.mxu0 0.0
      %237 = vmatprep.subr.mxu0 0.0
      %238 = vmatpush2.msra.mxu0 0.0
      %239 = vmatprep.subr.mxu0 0.0
      %240 = vmatpush2.msra.mxu0 0.0
      %241 = vmatprep.subr.mxu0 0.0
      %242 = vmatpush2.msra.mxu0 0.0
      %243 = vmatprep.subr.mxu0 0.0
      %244 = vmatpush2.msra.mxu0 0.0
      %245 = vmatprep.subr.mxu0 0.0
      %246 = vmatpush2.msra.mxu0 0.0
      %247 = vmatprep.subr.mxu0 0.0
      %248 = vmatpush2.msra.mxu0 0.0
      %249 = vmatprep.subr.mxu0 0.0
      %250 = vmatpush2.msra.mxu0 0.0
      %251 = vmatprep.subr.mxu0 0.0
      %252 = vmatpush2.msra.mxu0 0.0
      %253 = vmatprep.subr.mxu0 0.0
      %254 = vmatpush2.msra.mxu0 0.0
      %255 = vmatprep.subr.mxu0 0.0
      %256 = vmatpush2.msra.mxu0 0.0
      %257 = vmatprep.mubr.f32.mxu0 0.0
      %258 = vmatmul.mubr.f32.gmra.mxu0 %v191
      %v259 = vpop.f32.mrf.mxu0
      %v260 = vadd.f32 %v187, %v259
      %v261 = vpop.f32.mrf.mxu0
      %262 = vdwg.mxu0
      %v263 = vlaneseq
      %v264 = vshrl.u32 %v263, 7
      %v265 = vadd.s32 %v264, 8
      %v266 = vadd.s32 %v264, 16
      %v267 = vadd.s32 %v264, 24
      %v268 = vmul.u32 %v44, 8
      %v269 = vsub.s32 %v264, %v268
      %v270 = vsub.s32 %v265, %v268
      %v271 = vsub.s32 %v266, %v268
      %v272 = vsub.s32 %v267, %v268
      %vm273 = vcmp.ge.s32.totalorder %v269, 0
      %vm274 = vcmp.ge.s32.totalorder %v270, 0
      %vm275 = vcmp.ge.s32.totalorder %v271, 0
      %vm276 = vcmp.ge.s32.totalorder %v272, 0
      %vm277 = vcmp.lt.s32.totalorder %v269, 8
      %vm278 = vcmp.lt.s32.totalorder %v270, 8
      %vm279 = vcmp.lt.s32.totalorder %v271, 8
      %vm280 = vcmp.lt.s32.totalorder %v272, 8
      %vm281 = vmand %vm273, %vm277
      %vm282 = vmand %vm274, %vm278
      %vm283 = vmand %vm275, %vm279
      %vm284 = vmand %vm276, %vm280
      %v285 = vsel %vm281, 1, 0
      %v286 = vsel %vm282, 1, 0
      %v287 = vsel %vm283, 1, 0
      %v288 = vsel %vm284, 1, 0
      %v289 = vcvt.s32.f32 %v285
      %v290 = vcvt.s32.f32 %v286
      %v291 = vcvt.s32.f32 %v287
      %v292 = vcvt.s32.f32 %v288
      %vm293 = vcmask 31744
      %v295 = vsel %vm293, %v289, 0
      %v298 = vsel %vm293, %v290, 0
      %v301 = vsel %vm293, %v291, 0
      %v304 = vsel %vm293, %v292, 0
      %vm306 = vcmask 1043456
      %v308 = vsel %vm306, %v260, 0
      %310 = vmatprep.subr.mxu0 0.0
      %311 = vmatpush1.msra.mxu0 0.0
      %312 = vmatprep.subr.mxu0 0.0
      %313 = vmatpush1.msra.mxu0 0.0
      %314 = vmatprep.subr.mxu0 0.0
      %315 = vmatpush1.msra.mxu0 0.0
      %316 = vmatprep.subr.mxu0 0.0
      %317 = vmatpush1.msra.mxu0 0.0
      %318 = vmatprep.subr.mxu0 0.0
      %319 = vmatpush1.msra.mxu0 0.0
      %320 = vmatprep.subr.mxu0 0.0
      %321 = vmatpush1.msra.mxu0 0.0
      %322 = vmatprep.subr.mxu0 0.0
      %323 = vmatpush1.msra.mxu0 0.0
      %324 = vmatprep.subr.mxu0 0.0
      %325 = vmatpush1.msra.mxu0 0.0
      %326 = vmatprep.subr.mxu0 0.0
      %327 = vmatpush1.msra.mxu0 0.0
      %328 = vmatprep.subr.mxu0 0.0
      %329 = vmatpush1.msra.mxu0 0.0
      %330 = vmatprep.subr.mxu0 0.0
      %331 = vmatpush1.msra.mxu0 0.0
      %332 = vmatprep.subr.mxu0 0.0
      %333 = vmatpush1.msra.mxu0 0.0
      %334 = vmatprep.subr.mxu0 0.0
      %335 = vmatpush1.msra.mxu0 0.0
      %336 = vmatprep.subr.mxu0 0.0
      %337 = vmatpush1.msra.mxu0 0.0
      %338 = vmatprep.subr.mxu0 0.0
      %339 = vmatpush1.msra.mxu0 0.0
      %340 = vmatprep.subr.mxu0 0.0
      %341 = vmatpush1.msra.mxu0 %v308
      %342 = vmatprep.subr.mxu0 0.0
      %343 = vmatpush2.msra.mxu0 0.0
      %344 = vmatprep.subr.mxu0 0.0
      %345 = vmatpush2.msra.mxu0 0.0
      %346 = vmatprep.subr.mxu0 0.0
      %347 = vmatpush2.msra.mxu0 0.0
      %348 = vmatprep.subr.mxu0 0.0
      %349 = vmatpush2.msra.mxu0 0.0
      %350 = vmatprep.subr.mxu0 0.0
      %351 = vmatpush2.msra.mxu0 0.0
      %352 = vmatprep.subr.mxu0 0.0
      %353 = vmatpush2.msra.mxu0 0.0
      %354 = vmatprep.subr.mxu0 0.0
      %355 = vmatpush2.msra.mxu0 0.0
      %356 = vmatprep.subr.mxu0 0.0
      %357 = vmatpush2.msra.mxu0 0.0
      %358 = vmatprep.subr.mxu0 0.0
      %359 = vmatpush2.msra.mxu0 0.0
      %360 = vmatprep.subr.mxu0 0.0
      %361 = vmatpush2.msra.mxu0 0.0
      %362 = vmatprep.subr.mxu0 0.0
      %363 = vmatpush2.msra.mxu0 0.0
      %364 = vmatprep.subr.mxu0 0.0
      %365 = vmatpush2.msra.mxu0 0.0
      %366 = vmatprep.subr.mxu0 0.0
      %367 = vmatpush2.msra.mxu0 0.0
      %368 = vmatprep.subr.mxu0 0.0
      %369 = vmatpush2.msra.mxu0 0.0
      %370 = vmatprep.subr.mxu0 0.0
      %371 = vmatpush2.msra.mxu0 0.0
      %372 = vmatprep.subr.mxu0 0.0
      %373 = vmatpush2.msra.mxu0 0.0
      %374 = vmatprep.mubr.f32.mxu0 0.0
      %375 = vmatmul.mubr.f32.gmra.mxu0 %v295
      %v376 = vpop.f32.mrf.mxu0
      %v377 = vadd.f32 0.0, %v376
      %v378 = vpop.f32.mrf.mxu0
      %379 = vmatprep.mubr.f32.mxu0 0.0
      %380 = vmatmul.mubr.f32.gmra.mxu0 %v298
      %v381 = vpop.f32.mrf.mxu0
      %v382 = vadd.f32 0.0, %v381
      %v383 = vpop.f32.mrf.mxu0
      %384 = vmatprep.mubr.f32.mxu0 0.0
      %385 = vmatmul.mubr.f32.gmra.mxu0 %v301
      %v386 = vpop.f32.mrf.mxu0
      %v387 = vadd.f32 0.0, %v386
      %v388 = vpop.f32.mrf.mxu0
      %389 = vmatprep.mubr.f32.mxu0 0.0
      %390 = vmatmul.mubr.f32.gmra.mxu0 %v304
      %v391 = vpop.f32.mrf.mxu0
      %v392 = vadd.f32 0.0, %v391
      %v393 = vpop.f32.mrf.mxu0
      %394 = vdwg.mxu0
      %vm395 = vcmask 130048
      %v397 = vsel %vm395, %v157, 0
      %v400 = vsel %vm395, %v162, 0
      %v403 = vsel %vm395, %v167, 0
      %v406 = vsel %vm395, %v172, 0
      %408 = vmatprep.subr.mxu0 0.0
      %409 = vmatpush1.msra.mxu0 0.0
      %410 = vmatprep.subr.mxu0 0.0
      %411 = vmatpush1.msra.mxu0 0.0
      %412 = vmatprep.subr.mxu0 0.0
      %413 = vmatpush1.msra.mxu0 0.0
      %414 = vmatprep.subr.mxu0 0.0
      %415 = vmatpush1.msra.mxu0 0.0
      %416 = vmatprep.subr.mxu0 0.0
      %417 = vmatpush1.msra.mxu0 0.0
      %418 = vmatprep.subr.mxu0 0.0
      %419 = vmatpush1.msra.mxu0 0.0
      %420 = vmatprep.subr.mxu0 0.0
      %421 = vmatpush1.msra.mxu0 0.0
      %422 = vmatprep.subr.mxu0 0.0
      %423 = vmatpush1.msra.mxu0 0.0
      %424 = vmatprep.subr.mxu0 0.0
      %425 = vmatpush1.msra.mxu0 0.0
      %426 = vmatprep.subr.mxu0 0.0
      %427 = vmatpush1.msra.mxu0 0.0
      %428 = vmatprep.subr.mxu0 0.0
      %429 = vmatpush1.msra.mxu0 0.0
      %430 = vmatprep.subr.mxu0 0.0
      %431 = vmatpush1.msra.mxu0 0.0
      %432 = vmatprep.subr.mxu0 0.0
      %433 = vmatpush1.msra.mxu0 0.0
      %434 = vmatprep.subr.mxu0 0.0
      %435 = vmatpush1.msra.mxu0 0.0
      %436 = vmatprep.subr.mxu0 0.0
      %437 = vmatpush1.msra.mxu0 %v176
      %438 = vmatprep.subr.mxu0 0.0
      %439 = vmatpush1.msra.mxu0 %v175
      %440 = vmatprep.subr.mxu0 0.0
      %441 = vmatpush2.msra.mxu0 0.0
      %442 = vmatprep.subr.mxu0 0.0
      %443 = vmatpush2.msra.mxu0 0.0
      %444 = vmatprep.subr.mxu0 0.0
      %445 = vmatpush2.msra.mxu0 0.0
      %446 = vmatprep.subr.mxu0 0.0
      %447 = vmatpush2.msra.mxu0 0.0
      %448 = vmatprep.subr.mxu0 0.0
      %449 = vmatpush2.msra.mxu0 0.0
      %450 = vmatprep.subr.mxu0 0.0
      %451 = vmatpush2.msra.mxu0 0.0
      %452 = vmatprep.subr.mxu0 0.0
      %453 = vmatpush2.msra.mxu0 0.0
      %454 = vmatprep.subr.mxu0 0.0
      %455 = vmatpush2.msra.mxu0 0.0
      %456 = vmatprep.subr.mxu0 0.0
      %457 = vmatpush2.msra.mxu0 0.0
      %458 = vmatprep.subr.mxu0 0.0
      %459 = vmatpush2.msra.mxu0 0.0
      %460 = vmatprep.subr.mxu0 0.0
      %461 = vmatpush2.msra.mxu0 0.0
      %462 = vmatprep.subr.mxu0 0.0
      %463 = vmatpush2.msra.mxu0 0.0
      %464 = vmatprep.subr.mxu0 0.0
      %465 = vmatpush2.msra.mxu0 0.0
      %466 = vmatprep.subr.mxu0 0.0
      %467 = vmatpush2.msra.mxu0 0.0
      %468 = vmatprep.subr.mxu0 0.0
      %469 = vmatpush2.msra.mxu0 0.0
      %470 = vmatprep.subr.mxu0 0.0
      %471 = vmatpush2.msra.mxu0 0.0
      %472 = vmatprep.mubr.f32.mxu0 0.0
      %473 = vmatmul.mubr.f32.gmra.mxu0 %v397
      %v474 = vpop.f32.mrf.mxu0
      %v475 = vadd.f32 %v377, %v474
      %v476 = vpop.f32.mrf.mxu0
      %477 = vmatprep.mubr.f32.mxu0 0.0
      %478 = vmatmul.mubr.f32.gmra.mxu0 %v400
      %v479 = vpop.f32.mrf.mxu0
      %v480 = vadd.f32 %v382, %v479
      %v481 = vpop.f32.mrf.mxu0
      %482 = vmatprep.mubr.f32.mxu0 0.0
      %483 = vmatmul.mubr.f32.gmra.mxu0 %v403
      %v484 = vpop.f32.mrf.mxu0
      %v485 = vadd.f32 %v387, %v484
      %v486 = vpop.f32.mrf.mxu0
      %487 = vmatprep.mubr.f32.mxu0 0.0
      %488 = vmatmul.mubr.f32.gmra.mxu0 %v406
      %v489 = vpop.f32.mrf.mxu0
      %v490 = vadd.f32 %v392, %v489
      %v491 = vpop.f32.mrf.mxu0
      %492 = vdwg.mxu0
      %v493 = vld [vmem:[%s6] sm:$0xf]
      %v495 = vsel %vm306, %v493, 0
      %497 = vmatprep.subr.mxu0 0.0
      %498 = vmatpush1.msra.mxu0 0.0
      %499 = vmatprep.subr.mxu0 0.0
      %500 = vmatpush1.msra.mxu0 0.0
      %501 = vmatprep.subr.mxu0 0.0
      %502 = vmatpush1.msra.mxu0 0.0
      %503 = vmatprep.subr.mxu0 0.0
      %504 = vmatpush1.msra.mxu0 0.0
      %505 = vmatprep.subr.mxu0 0.0
      %506 = vmatpush1.msra.mxu0 0.0
      %507 = vmatprep.subr.mxu0 0.0
      %508 = vmatpush1.msra.mxu0 0.0
      %509 = vmatprep.subr.mxu0 0.0
      %510 = vmatpush1.msra.mxu0 0.0
      %511 = vmatprep.subr.mxu0 0.0
      %512 = vmatpush1.msra.mxu0 0.0
      %513 = vmatprep.subr.mxu0 0.0
      %514 = vmatpush1.msra.mxu0 0.0
      %515 = vmatprep.subr.mxu0 0.0
      %516 = vmatpush1.msra.mxu0 0.0
      %517 = vmatprep.subr.mxu0 0.0
      %518 = vmatpush1.msra.mxu0 0.0
      %519 = vmatprep.subr.mxu0 0.0
      %520 = vmatpush1.msra.mxu0 0.0
      %521 = vmatprep.subr.mxu0 0.0
      %522 = vmatpush1.msra.mxu0 0.0
      %523 = vmatprep.subr.mxu0 0.0
      %524 = vmatpush1.msra.mxu0 0.0
      %525 = vmatprep.subr.mxu0 0.0
      %526 = vmatpush1.msra.mxu0 0.0
      %527 = vmatprep.subr.mxu0 0.0
      %528 = vmatpush1.msra.mxu0 %v495
      %529 = vmatprep.subr.mxu0 0.0
      %530 = vmatpush2.msra.mxu0 0.0
      %531 = vmatprep.subr.mxu0 0.0
      %532 = vmatpush2.msra.mxu0 0.0
      %533 = vmatprep.subr.mxu0 0.0
      %534 = vmatpush2.msra.mxu0 0.0
      %535 = vmatprep.subr.mxu0 0.0
      %536 = vmatpush2.msra.mxu0 0.0
      %537 = vmatprep.subr.mxu0 0.0
      %538 = vmatpush2.msra.mxu0 0.0
      %539 = vmatprep.subr.mxu0 0.0
      %540 = vmatpush2.msra.mxu0 0.0
      %541 = vmatprep.subr.mxu0 0.0
      %542 = vmatpush2.msra.mxu0 0.0
      %543 = vmatprep.subr.mxu0 0.0
      %544 = vmatpush2.msra.mxu0 0.0
      %545 = vmatprep.subr.mxu0 0.0
      %546 = vmatpush2.msra.mxu0 0.0
      %547 = vmatprep.subr.mxu0 0.0
      %548 = vmatpush2.msra.mxu0 0.0
      %549 = vmatprep.subr.mxu0 0.0
      %550 = vmatpush2.msra.mxu0 0.0
      %551 = vmatprep.subr.mxu0 0.0
      %552 = vmatpush2.msra.mxu0 0.0
      %553 = vmatprep.subr.mxu0 0.0
      %554 = vmatpush2.msra.mxu0 0.0
      %555 = vmatprep.subr.mxu0 0.0
      %556 = vmatpush2.msra.mxu0 0.0
      %557 = vmatprep.subr.mxu0 0.0
      %558 = vmatpush2.msra.mxu0 0.0
      %559 = vmatprep.subr.mxu0 0.0
      %560 = vmatpush2.msra.mxu0 0.0
      %561 = vmatprep.mubr.f32.mxu0 0.0
      %562 = vmatmul.mubr.f32.gmra.mxu0 %v295
      %v563 = vpop.f32.mrf.mxu0
      %v564 = vadd.f32 0.0, %v563
      %v565 = vpop.f32.mrf.mxu0
      %566 = vmatprep.mubr.f32.mxu0 0.0
      %567 = vmatmul.mubr.f32.gmra.mxu0 %v298
      %v568 = vpop.f32.mrf.mxu0
      %v569 = vadd.f32 0.0, %v568
      %v570 = vpop.f32.mrf.mxu0
      %571 = vmatprep.mubr.f32.mxu0 0.0
      %572 = vmatmul.mubr.f32.gmra.mxu0 %v301
      %v573 = vpop.f32.mrf.mxu0
      %v574 = vadd.f32 0.0, %v573
      %v575 = vpop.f32.mrf.mxu0
      %576 = vmatprep.mubr.f32.mxu0 0.0
      %577 = vmatmul.mubr.f32.gmra.mxu0 %v304
      %v578 = vpop.f32.mrf.mxu0
      %v579 = vadd.f32 0.0, %v578
      %v580 = vpop.f32.mrf.mxu0
      %581 = vdwg.mxu0
      %v582 = vxor.u32 %v475, 2147483648
      %v583 = vxor.u32 %v480, 2147483648
      %v584 = vxor.u32 %v485, 2147483648
      %v585 = vxor.u32 %v490, 2147483648
      %v586 = vmul.f32 %v582, 1.442695
      %v587 = vpow.pop %v586
      %v588 = vmul.f32 %v583, 1.442695
      %v589 = vpow.pop %v588
      %v590 = vmul.f32 %v584, 1.442695
      %v591 = vpow.pop %v590
      %v592 = vmul.f32 %v585, 1.442695
      %v593 = vpow.pop %v592
      %v594 = vadd.f32 %v587, 1.0
      %v595 = vadd.f32 %v589, 1.0
      %v596 = vadd.f32 %v591, 1.0
      %v597 = vadd.f32 %v593, 1.0
      %v598 = vrcp.pop %v594
      %v599 = vmul.f32 1.0, %v598
      %v600 = vrcp.pop %v595
      %v601 = vmul.f32 1.0, %v600
      %v602 = vrcp.pop %v596
      %v603 = vmul.f32 1.0, %v602
      %v604 = vrcp.pop %v597
      %v605 = vmul.f32 1.0, %v604
      %v606 = vtanh.pop %v475
      %v607 = vtanh.pop %v480
      %v608 = vtanh.pop %v485
      %v609 = vtanh.pop %v490
      %614 = vrot.lane.b32.xlu0 %v564, 32
      %v615 = vpop.permute.xlu0 %614
      %616 = vrot.lane.b32.xlu0 %v569, 32
      %v617 = vpop.permute.xlu0 %616
      %618 = vrot.lane.b32.xlu0 %v574, 32
      %v619 = vpop.permute.xlu0 %618
      %620 = vrot.lane.b32.xlu0 %v579, 32
      %v621 = vpop.permute.xlu0 %620
      %v626 = vmul.f32 %v599, %v615
      %v627 = vmul.f32 %v601, %v617
      %v628 = vmul.f32 %v603, %v619
      %v629 = vmul.f32 %v605, %v621
      %634 = vrot.lane.b32.xlu0 %v606, 32
      %v635 = vpop.permute.xlu0 %634
      %636 = vrot.lane.b32.xlu0 %v607, 32
      %v637 = vpop.permute.xlu0 %636
      %638 = vrot.lane.b32.xlu0 %v608, 32
      %v639 = vpop.permute.xlu0 %638
      %640 = vrot.lane.b32.xlu0 %v609, 32
      %v641 = vpop.permute.xlu0 %640
      %v646 = vmul.f32 %v599, %v635
      %v647 = vmul.f32 %v601, %v637
      %v648 = vmul.f32 %v603, %v639
      %v649 = vmul.f32 %v605, %v641
      %654 = vrot.lane.b32.xlu0 %v646, 32
      %v655 = vpop.permute.xlu0 %654
      %656 = vrot.lane.b32.xlu0 %v647, 32
      %v657 = vpop.permute.xlu0 %656
      %658 = vrot.lane.b32.xlu0 %v648, 32
      %v659 = vpop.permute.xlu0 %658
      %660 = vrot.lane.b32.xlu0 %v649, 32
      %v661 = vpop.permute.xlu0 %660
      %v666 = vadd.f32 %v626, %v655
      %v667 = vadd.f32 %v627, %v657
      %v668 = vadd.f32 %v628, %v659
      %v669 = vadd.f32 %v629, %v661
      %v670 = vtanh.pop %v666
      %v671 = vtanh.pop %v667
      %v672 = vtanh.pop %v668
      %v673 = vtanh.pop %v669
      %678 = vrot.lane.b32.xlu0 %v670, 32
      %v679 = vpop.permute.xlu0 %678
      %680 = vrot.lane.b32.xlu0 %v671, 32
      %v681 = vpop.permute.xlu0 %680
      %682 = vrot.lane.b32.xlu0 %v672, 32
      %v683 = vpop.permute.xlu0 %682
      %684 = vrot.lane.b32.xlu0 %v673, 32
      %v685 = vpop.permute.xlu0 %684
      %v690 = vmul.f32 %v599, %v679
      %v691 = vmul.f32 %v601, %v681
      %v692 = vmul.f32 %v603, %v683
      %v693 = vmul.f32 %v605, %v685
      %698 = vrot.lane.b32.xlu0 %v690, 64
      %v699 = vpop.permute.xlu0 %698
      %700 = vrot.lane.b32.xlu0 %v691, 64
      %v701 = vpop.permute.xlu0 %700
      %702 = vrot.lane.b32.xlu0 %v692, 64
      %v703 = vpop.permute.xlu0 %702
      %704 = vrot.lane.b32.xlu0 %v693, 64
      %v705 = vpop.permute.xlu0 %704
      %710 = vst.msk [vmem:[#allocation2] sm:$0xff] %vm189, %v699
      %711 = vst.msk [vmem:[#allocation2 + $0x8] sm:$0xff] %vm189, %v701
      %712 = vst.msk [vmem:[#allocation2 + $0x10] sm:$0xff] %vm189, %v703
      %713 = vst.msk [vmem:[#allocation2 + $0x18] sm:$0xff] %vm189, %v705
      %v714 = vmul.u32 %v264, 8
      %v715 = vadd.s32 %v714, 7
      %vm716 = vcmp.eq.s32.totalorder %v715, %v44
      %v717 = vsel %vm716, 1, 0
      %v718 = vcvt.s32.f32 %v717
      %v720 = vsel %vm189, %v718, 0
      %722 = vmatprep.subr.mxu0 0.0
      %723 = vmatpush1.msra.mxu0 0.0
      %724 = vmatprep.subr.mxu0 0.0
      %725 = vmatpush1.msra.mxu0 0.0
      %726 = vmatprep.subr.mxu0 0.0
      %727 = vmatpush1.msra.mxu0 0.0
      %728 = vmatprep.subr.mxu0 0.0
      %729 = vmatpush1.msra.mxu0 0.0
      %730 = vmatprep.subr.mxu0 0.0
      %731 = vmatpush1.msra.mxu0 0.0
      %732 = vmatprep.subr.mxu0 0.0
      %733 = vmatpush1.msra.mxu0 0.0
      %734 = vmatprep.subr.mxu0 0.0
      %735 = vmatpush1.msra.mxu0 0.0
      %736 = vmatprep.subr.mxu0 0.0
      %737 = vmatpush1.msra.mxu0 0.0
      %738 = vmatprep.subr.mxu0 0.0
      %739 = vmatpush1.msra.mxu0 0.0
      %740 = vmatprep.subr.mxu0 0.0
      %741 = vmatpush1.msra.mxu0 0.0
      %742 = vmatprep.subr.mxu0 0.0
      %743 = vmatpush1.msra.mxu0 0.0
      %744 = vmatprep.subr.mxu0 0.0
      %745 = vmatpush1.msra.mxu0 0.0
      %746 = vmatprep.subr.mxu0 0.0
      %747 = vmatpush1.msra.mxu0 %v705
      %748 = vmatprep.subr.mxu0 0.0
      %749 = vmatpush1.msra.mxu0 %v703
      %750 = vmatprep.subr.mxu0 0.0
      %751 = vmatpush1.msra.mxu0 %v701
      %752 = vmatprep.subr.mxu0 0.0
      %753 = vmatpush1.msra.mxu0 %v699
      %754 = vmatprep.subr.mxu0 0.0
      %755 = vmatpush2.msra.mxu0 0.0
      %756 = vmatprep.subr.mxu0 0.0
      %757 = vmatpush2.msra.mxu0 0.0
      %758 = vmatprep.subr.mxu0 0.0
      %759 = vmatpush2.msra.mxu0 0.0
      %760 = vmatprep.subr.mxu0 0.0
      %761 = vmatpush2.msra.mxu0 0.0
      %762 = vmatprep.subr.mxu0 0.0
      %763 = vmatpush2.msra.mxu0 0.0
      %764 = vmatprep.subr.mxu0 0.0
      %765 = vmatpush2.msra.mxu0 0.0
      %766 = vmatprep.subr.mxu0 0.0
      %767 = vmatpush2.msra.mxu0 0.0
      %768 = vmatprep.subr.mxu0 0.0
      %769 = vmatpush2.msra.mxu0 0.0
      %770 = vmatprep.subr.mxu0 0.0
      %771 = vmatpush2.msra.mxu0 0.0
      %772 = vmatprep.subr.mxu0 0.0
      %773 = vmatpush2.msra.mxu0 0.0
      %774 = vmatprep.subr.mxu0 0.0
      %775 = vmatpush2.msra.mxu0 0.0
      %776 = vmatprep.subr.mxu0 0.0
      %777 = vmatpush2.msra.mxu0 0.0
      %778 = vmatprep.subr.mxu0 0.0
      %779 = vmatpush2.msra.mxu0 0.0
      %780 = vmatprep.subr.mxu0 0.0
      %781 = vmatpush2.msra.mxu0 0.0
      %782 = vmatprep.subr.mxu0 0.0
      %783 = vmatpush2.msra.mxu0 0.0
      %784 = vmatprep.subr.mxu0 0.0
      %785 = vmatpush2.msra.mxu0 0.0
      %786 = vmatprep.mubr.f32.mxu0 0.0
      %787 = vmatmul.mubr.f32.gmra.mxu0 %v720
      %v788 = vpop.f32.mrf.mxu0
      %v789 = vadd.f32 0.0, %v788
      %v790 = vpop.f32.mrf.mxu0
      %791 = vdwg.mxu0
      %vm792 = vcmask 257024
      %793 = vst.msk [vmem:[%s10] sm:$0xf] %vm792, %v789
      %798 = vrot.lane.b32.xlu0 %v666, 96
      %v799 = vpop.permute.xlu0 %798
      %800 = vrot.lane.b32.xlu0 %v667, 96
      %v801 = vpop.permute.xlu0 %800
      %802 = vrot.lane.b32.xlu0 %v668, 96
      %v803 = vpop.permute.xlu0 %802
      %804 = vrot.lane.b32.xlu0 %v669, 96
      %v805 = vpop.permute.xlu0 %804
      %810 = vmatprep.subr.mxu0 0.0
      %811 = vmatpush1.msra.mxu0 0.0
      %812 = vmatprep.subr.mxu0 0.0
      %813 = vmatpush1.msra.mxu0 0.0
      %814 = vmatprep.subr.mxu0 0.0
      %815 = vmatpush1.msra.mxu0 0.0
      %816 = vmatprep.subr.mxu0 0.0
      %817 = vmatpush1.msra.mxu0 0.0
      %818 = vmatprep.subr.mxu0 0.0
      %819 = vmatpush1.msra.mxu0 0.0
      %820 = vmatprep.subr.mxu0 0.0
      %821 = vmatpush1.msra.mxu0 0.0
      %822 = vmatprep.subr.mxu0 0.0
      %823 = vmatpush1.msra.mxu0 0.0
      %824 = vmatprep.subr.mxu0 0.0
      %825 = vmatpush1.msra.mxu0 0.0
      %826 = vmatprep.subr.mxu0 0.0
      %827 = vmatpush1.msra.mxu0 0.0
      %828 = vmatprep.subr.mxu0 0.0
      %829 = vmatpush1.msra.mxu0 0.0
      %830 = vmatprep.subr.mxu0 0.0
      %831 = vmatpush1.msra.mxu0 0.0
      %832 = vmatprep.subr.mxu0 0.0
      %833 = vmatpush1.msra.mxu0 0.0
      %834 = vmatprep.subr.mxu0 0.0
      %835 = vmatpush1.msra.mxu0 %v805
      %836 = vmatprep.subr.mxu0 0.0
      %837 = vmatpush1.msra.mxu0 %v803
      %838 = vmatprep.subr.mxu0 0.0
      %839 = vmatpush1.msra.mxu0 %v801
      %840 = vmatprep.subr.mxu0 0.0
      %841 = vmatpush1.msra.mxu0 %v799
      %842 = vmatprep.subr.mxu0 0.0
      %843 = vmatpush2.msra.mxu0 0.0
      %844 = vmatprep.subr.mxu0 0.0
      %845 = vmatpush2.msra.mxu0 0.0
      %846 = vmatprep.subr.mxu0 0.0
      %847 = vmatpush2.msra.mxu0 0.0
      %848 = vmatprep.subr.mxu0 0.0
      %849 = vmatpush2.msra.mxu0 0.0
      %850 = vmatprep.subr.mxu0 0.0
      %851 = vmatpush2.msra.mxu0 0.0
      %852 = vmatprep.subr.mxu0 0.0
      %853 = vmatpush2.msra.mxu0 0.0
      %854 = vmatprep.subr.mxu0 0.0
      %855 = vmatpush2.msra.mxu0 0.0
      %856 = vmatprep.subr.mxu0 0.0
      %857 = vmatpush2.msra.mxu0 0.0
      %858 = vmatprep.subr.mxu0 0.0
      %859 = vmatpush2.msra.mxu0 0.0
      %860 = vmatprep.subr.mxu0 0.0
      %861 = vmatpush2.msra.mxu0 0.0
      %862 = vmatprep.subr.mxu0 0.0
      %863 = vmatpush2.msra.mxu0 0.0
      %864 = vmatprep.subr.mxu0 0.0
      %865 = vmatpush2.msra.mxu0 0.0
      %866 = vmatprep.subr.mxu0 0.0
      %867 = vmatpush2.msra.mxu0 0.0
      %868 = vmatprep.subr.mxu0 0.0
      %869 = vmatpush2.msra.mxu0 0.0
      %870 = vmatprep.subr.mxu0 0.0
      %871 = vmatpush2.msra.mxu0 0.0
      %872 = vmatprep.subr.mxu0 0.0
      %873 = vmatpush2.msra.mxu0 0.0
      %874 = vmatprep.mubr.f32.mxu0 0.0
      %875 = vmatmul.mubr.f32.gmra.mxu0 %v720
      %v876 = vpop.f32.mrf.mxu0
      %v877 = vadd.f32 0.0, %v876
      %v878 = vpop.f32.mrf.mxu0
      %879 = vdwg.mxu0
      %s880 = scalar_lea.vmem %s10, 4
      %881 = vst.msk [vmem:[%s880] sm:$0xf] %vm792, %v877
    $region41: #{lstm_forward.1} parent=1 // pred_fallthru
      _
    %v882 = vld [vmem:[#allocation2] sm:$0xff]
    %v883 = vld [vmem:[#allocation2 + $0x8] sm:$0xff]
    %v884 = vld [vmem:[#allocation2 + $0x10] sm:$0xff]
    %v885 = vld [vmem:[#allocation2 + $0x18] sm:$0xff]
    %v886 = vld [vmem:[%s7] sm:$0xff]
    %v887 = vld [vmem:[%s7 + $0x8] sm:$0xff]
    %v888 = vld [vmem:[%s7 + $0x10] sm:$0xff]
    %v889 = vld [vmem:[%s7 + $0x18] sm:$0xff]
    %v890 = vld [vmem:[%s8] sm:$0x1]
    %v892 = vlaneseq
    %v893 = vshrl.u32 %v892, 7
    %v894 = vsub.s32 0, %v893
    %v895 = vrot.slane %v890, %v894
    %vm897 = vcmask 261120
    %v899 = vsel %vm897, %v882, 0
    %v902 = vsel %vm897, %v883, 0
    %v905 = vsel %vm897, %v884, 0
    %v908 = vsel %vm897, %v885, 0
    %910 = vmatprep.subr.mxu0 0.0
    %911 = vmatpush1.msra.mxu0 0.0
    %912 = vmatprep.subr.mxu0 0.0
    %913 = vmatpush1.msra.mxu0 0.0
    %914 = vmatprep.subr.mxu0 0.0
    %915 = vmatpush1.msra.mxu0 0.0
    %916 = vmatprep.subr.mxu0 0.0
    %917 = vmatpush1.msra.mxu0 0.0
    %918 = vmatprep.subr.mxu0 0.0
    %919 = vmatpush1.msra.mxu0 0.0
    %920 = vmatprep.subr.mxu0 0.0
    %921 = vmatpush1.msra.mxu0 0.0
    %922 = vmatprep.subr.mxu0 0.0
    %923 = vmatpush1.msra.mxu0 0.0
    %924 = vmatprep.subr.mxu0 0.0
    %925 = vmatpush1.msra.mxu0 0.0
    %926 = vmatprep.subr.mxu0 0.0
    %927 = vmatpush1.msra.mxu0 0.0
    %928 = vmatprep.subr.mxu0 0.0
    %929 = vmatpush1.msra.mxu0 0.0
    %930 = vmatprep.subr.mxu0 0.0
    %931 = vmatpush1.msra.mxu0 0.0
    %932 = vmatprep.subr.mxu0 0.0
    %933 = vmatpush1.msra.mxu0 0.0
    %934 = vmatprep.subr.mxu0 0.0
    %935 = vmatpush1.msra.mxu0 %v889
    %936 = vmatprep.subr.mxu0 0.0
    %937 = vmatpush1.msra.mxu0 %v888
    %938 = vmatprep.subr.mxu0 0.0
    %939 = vmatpush1.msra.mxu0 %v887
    %940 = vmatprep.subr.mxu0 0.0
    %941 = vmatpush1.msra.mxu0 %v886
    %942 = vmatprep.subr.mxu0 0.0
    %943 = vmatpush2.msra.mxu0 0.0
    %944 = vmatprep.subr.mxu0 0.0
    %945 = vmatpush2.msra.mxu0 0.0
    %946 = vmatprep.subr.mxu0 0.0
    %947 = vmatpush2.msra.mxu0 0.0
    %948 = vmatprep.subr.mxu0 0.0
    %949 = vmatpush2.msra.mxu0 0.0
    %950 = vmatprep.subr.mxu0 0.0
    %951 = vmatpush2.msra.mxu0 0.0
    %952 = vmatprep.subr.mxu0 0.0
    %953 = vmatpush2.msra.mxu0 0.0
    %954 = vmatprep.subr.mxu0 0.0
    %955 = vmatpush2.msra.mxu0 0.0
    %956 = vmatprep.subr.mxu0 0.0
    %957 = vmatpush2.msra.mxu0 0.0
    %958 = vmatprep.subr.mxu0 0.0
    %959 = vmatpush2.msra.mxu0 0.0
    %960 = vmatprep.subr.mxu0 0.0
    %961 = vmatpush2.msra.mxu0 0.0
    %962 = vmatprep.subr.mxu0 0.0
    %963 = vmatpush2.msra.mxu0 0.0
    %964 = vmatprep.subr.mxu0 0.0
    %965 = vmatpush2.msra.mxu0 0.0
    %966 = vmatprep.subr.mxu0 0.0
    %967 = vmatpush2.msra.mxu0 0.0
    %968 = vmatprep.subr.mxu0 0.0
    %969 = vmatpush2.msra.mxu0 0.0
    %970 = vmatprep.subr.mxu0 0.0
    %971 = vmatpush2.msra.mxu0 0.0
    %972 = vmatprep.subr.mxu0 0.0
    %973 = vmatpush2.msra.mxu0 0.0
    %974 = vmatprep.mubr.f32.mxu0 0.0
    %975 = vmatmul.mubr.f32.gmra.mxu0 %v899
    %v976 = vpop.f32.mrf.mxu0
    %v977 = vadd.f32 %v895, %v976
    %v978 = vpop.f32.mrf.mxu0
    %979 = vmatprep.mubr.f32.mxu0 0.0
    %980 = vmatmul.mubr.f32.gmra.mxu0 %v902
    %v981 = vpop.f32.mrf.mxu0
    %v982 = vadd.f32 %v895, %v981
    %v983 = vpop.f32.mrf.mxu0
    %984 = vmatprep.mubr.f32.mxu0 0.0
    %985 = vmatmul.mubr.f32.gmra.mxu0 %v905
    %v986 = vpop.f32.mrf.mxu0
    %v987 = vadd.f32 %v895, %v986
    %v988 = vpop.f32.mrf.mxu0
    %989 = vmatprep.mubr.f32.mxu0 0.0
    %990 = vmatmul.mubr.f32.gmra.mxu0 %v908
    %v991 = vpop.f32.mrf.mxu0
    %v992 = vadd.f32 %v895, %v991
    %v993 = vpop.f32.mrf.mxu0
    %994 = vdwg.mxu0
    %vm995 = vcmask 523264
    %996 = vst.msk [vmem:[#allocation3] sm:$0xff] %vm995, %v977
    %997 = vst.msk [vmem:[#allocation3 + $0x8] sm:$0xff] %vm995, %v982
    %998 = vst.msk [vmem:[#allocation3 + $0x10] sm:$0xff] %vm995, %v987
    %999 = vst.msk [vmem:[#allocation3 + $0x18] sm:$0xff] %vm995, %v992
    // Predicated region
    $region42: #{lstm_forward.1} parent=1 // pred_check
      _
    $region43: #{lstm_forward.1} parent=1 // pred_check_branch
      %1001 = sbr.rel (0) target = $region45
    $region44: #{lstm_forward.1} parent=1 // pred_region
      %s1003 = ssub.s32 512, 512
      %1004 = vsyncadd [#allocation4], %s1003
      %s1005 = sshll.u32 [#allocation3], 4
      %s1006 = int_to_ptr.vmem [resolvable:$true] %s1005
      %1011 = dma.vmem_to_hbm [thread:$0]  %s1006, 512, %s9, [#allocation4], 128, 128, 8
    $region45: #{lstm_forward.1} parent=1 // pred_fallthru
      _
    // Predicated region
    $region46: #{lstm_forward.1} parent=1 // pred_check
      _
    $region47: #{lstm_forward.1} parent=1 // pred_check_branch
      %1013 = sbr.rel (0) target = $region49
    $region48: #{lstm_forward.1} parent=1 // pred_region
      _
    $region49: #{lstm_forward.1} parent=1 // pred_fallthru
      _
    // Predicated region
    $region50: #{lstm_forward.1} parent=1 // pred_check
      _
    $region51: #{lstm_forward.1} parent=1 // pred_check_branch
      %1015 = sbr.rel (0) target = $region53
    $region52: #{lstm_forward.1} parent=1 // pred_region
      %1016 = dma.done [#allocation4], 512
    $region53: #{lstm_forward.1} parent=1 // pred_fallthru
      _
    // Predicated region
    $region54: #{lstm_forward.1} parent=1 // pred_check
      _
    $region55: #{lstm_forward.1} parent=1 // pred_check_branch
      %1018 = sbr.rel (0) target = $region57
    $region56: #{lstm_forward.1} parent=1 // pred_region
      _
    $region57: #{lstm_forward.1} parent=1 // pred_fallthru
      _
    %1019 = vsyncpa [#allocation4], 1

</llo_original>
